<compile_context>
chip_gen: v6e
topology: v6e:2x2x1
jax: 0.10.0
libtpu: 0.0.40
codegen_flags: <defaults>
</compile_context>

<pallas_src>
import jax
import jax.numpy as jnp
from jax.experimental import pallas as pl
from jax.experimental.pallas import tpu as pltpu

_X_TILE_TARGET_BYTES = 16 * 1024 * 1024  # per x buffer (double-buffered by Pallas)


def _value_reward_head_kernel(x_ref, w1_ref, b1_ref, w2_ref, b2_ref, o_ref):
    # Linear(H, 64): native-dtype LHS/RHS straight into the MXU, f32 accumulate.
    h = jnp.dot(x_ref[...], w1_ref[...], preferred_element_type=jnp.float32)
    h = h + b1_ref[...]                                     # (TILE_N, 64) f32
    # Exact GELU (PyTorch nn.GELU default, erf-based).
    h = 0.5 * h * (1.0 + jax.lax.erf(h * (2.0 ** -0.5)))
    # Linear(64, 1) as VPU multiply + lane reduction (w2 passed as a (1, 64) row);
    # avoids a 1-output-column MXU matmul and keeps the MXU slot free.
    out = jnp.sum(h * w2_ref[...], axis=-1, keepdims=True) + b2_ref[...]
    o_ref[...] = out.astype(o_ref.dtype)                    # (TILE_N, 1)


def _vmem_capacity_bytes():
    try:
        return int(pltpu.get_tpu_info().vmem_capacity_bytes)
    except Exception:
        return 64 * 1024 * 1024  # conservative: v7x per-core physical VMEM


def _sublane_multiple(dtype):
    itemsize = jnp.dtype(dtype).itemsize
    return max(8, 32 // itemsize)  # 8 for f32, 16 for bf16, 32 for int8/fp8


def _choose_tile_n(n_rows, hidden, dtype):
    """Rows per x tile: ~16 MiB per buffer, rounded to the dtype's sublane multiple."""
    itemsize = jnp.dtype(dtype).itemsize
    sub = _sublane_multiple(dtype)
    tile = _X_TILE_TARGET_BYTES // max(1, hidden * itemsize)
    tile = max(sub, (tile // sub) * sub)
    n_rounded = -(-n_rows // sub) * sub          # never exceed the (rounded) row count
    return min(tile, n_rounded)


def value_reward_head(emb, w1, b1, w2, b2):
    """emb: (..., H) -> (...)  matching ValueRewardHead.forward."""
    orig_shape = emb.shape
    H = orig_shape[-1]
    x = emb.reshape(-1, H)
    N = x.shape[0]

    # Dtype alignment: the MXU operands match the activation dtype (no silent
    # f32 promotion of the whole tile); the tiny bias / second-layer params
    # stay f32 since the activation is f32-accumulated anyway.
    w1 = w1.astype(x.dtype)                        # (H, 64)
    b1 = b1.astype(jnp.float32).reshape(1, 64)
    w2_row = w2.astype(jnp.float32).reshape(1, 64)
    b2 = b2.astype(jnp.float32).reshape(1, 1)

    itemsize = jnp.dtype(x.dtype).itemsize
    tile_n = _choose_tile_n(N, H, x.dtype)
    n_tiles = pl.cdiv(N, tile_n)                   # ragged final block is masked

    # Generation-aware scoped-VMEM limit: 2 x-buffers + (double-buffered)
    # weights + output + headroom, capped below physical per-core VMEM.
    x_tile_bytes = tile_n * H * itemsize
    w1_bytes = H * 64 * itemsize
    need = 2 * x_tile_bytes + 2 * w1_bytes + 2 * tile_n * 4 + (1 << 20)
    cap = _vmem_capacity_bytes()
    vmem_limit = int(max(need, min(cap - (8 << 20),
                                   max(32 << 20, need + (4 << 20)))))

    out = pl.pallas_call(
        _value_reward_head_kernel,
        out_shape=jax.ShapeDtypeStruct((N, 1), emb.dtype),
        grid_spec=pltpu.PrefetchScalarGridSpec(
            num_scalar_prefetch=0,
            grid=(n_tiles,),
            in_specs=[
                pl.BlockSpec((tile_n, H), lambda i: (i, 0)),   # x (tiled over rows)
                pl.BlockSpec((H, 64), lambda i: (0, 0)),       # W1 (VMEM-resident)
                pl.BlockSpec((1, 64), lambda i: (0, 0)),       # b1
                pl.BlockSpec((1, 64), lambda i: (0, 0)),       # W2 as a row
                pl.BlockSpec((1, 1), lambda i: (0, 0)),        # b2
            ],
            out_specs=pl.BlockSpec((tile_n, 1), lambda i: (i, 0)),
        ),
        compiler_params=pltpu.CompilerParams(
            # Row tiles are independent -> shard across TensorCores on v7x.
            # TODO(synk): confirm via profile that both v7x TCs are used; if not,
            # switch this axis to pltpu.CORE_PARALLEL / explicit core split.
            dimension_semantics=("parallel",),
            vmem_limit_bytes=vmem_limit,
        ),
    )(x, w1, b1, w2_row, b2)

    return out.reshape(orig_shape[:-1])


def init_params(hidden_size, key):
    """Mirror layer_init(): orthogonal init (gain sqrt(2) / 1.0) on the torch
    (out, in) shape, transposed to the (in, out) layout the kernel uses.
    Biases are zero."""
    k1, k2 = jax.random.split(key)
    ortho = jax.nn.initializers.orthogonal
    w1 = ortho(scale=2.0 ** 0.5)(k1, (64, hidden_size), jnp.float32).T   # (H, 64)
    b1 = jnp.zeros((1, 64), jnp.float32)
    w2 = ortho(scale=1.0)(k2, (1, 64), jnp.float32).T                    # (64, 1)
    b2 = jnp.zeros((1, 1), jnp.float32)
    return w1, b1, w2, b2


if __name__ == "__main__":
    hidden_size = 32
    batch, seq = 2, 8

    key = jax.random.PRNGKey(0)
    k_x, k_p, k_r = jax.random.split(key, 3)
    emb = jax.random.normal(k_x, (batch, seq, hidden_size), jnp.float32)
    w1, b1, w2, b2 = init_params(hidden_size, k_p)

    def ref_head(e):
        hr = e.reshape(-1, hidden_size).astype(jnp.float32) @ w1 + b1
        hr = 0.5 * hr * (1.0 + jax.lax.erf(hr * (2.0 ** -0.5)))
        return (hr @ w2 + b2).reshape(e.shape[:-1])

    # f32 path.
    out = jax.block_until_ready(value_reward_head(emb, w1, b1, w2, b2))
    ref = ref_head(emb)
    assert out.shape == (batch, seq)
    assert jnp.allclose(out, ref, atol=1e-5), "f32 mismatch vs reference"

    # bf16 path (native bf16 MXU matmul with f32 accumulation).
    emb_bf16 = emb.astype(jnp.bfloat16)
    out_bf16 = jax.block_until_ready(value_reward_head(emb_bf16, w1, b1, w2, b2))
    ref_bf16 = ref_head(emb_bf16.astype(jnp.float32))
    assert out_bf16.shape == (batch, seq)
    assert jnp.allclose(out_bf16.astype(jnp.float32), ref_bf16, atol=1e-1, rtol=1e-1), \
        "bf16 mismatch vs reference"

    # Ragged row count: exercises the masked final block (no jnp.pad HBM copy).
    emb_ragged = jax.random.normal(k_r, (15, hidden_size), jnp.float32)
    out_ragged = jax.block_until_ready(value_reward_head(emb_ragged, w1, b1, w2, b2))
    ref_ragged = ref_head(emb_ragged)
    assert out_ragged.shape == (15,)
    assert jnp.allclose(out_ragged, ref_ragged, atol=1e-5), "ragged mismatch vs reference"

    print("KERNEL_OK")
</pallas_src>

<mosaic_0001>
module attributes {stable_mosaic.version = 11 : i64} {
  func.func @_value_reward_head_kernel(%arg0: i32, %arg1: memref<16x32xf32, #tpu.memory_space<vmem>>, %arg2: memref<32x64xf32, #tpu.memory_space<vmem>>, %arg3: memref<1x64xf32, #tpu.memory_space<vmem>>, %arg4: memref<1x64xf32, #tpu.memory_space<vmem>>, %arg5: memref<1x1xf32, #tpu.memory_space<vmem>>, %arg6: memref<16x1xf32, #tpu.memory_space<vmem>>) attributes {dimension_semantics = [#tpu.dimension_semantics<parallel>], iteration_bounds = array<i64: 1>, scalar_prefetch = 0 : i64, scratch_operands = 0 : i64, tpu.core_type = #tpu.core_type<tc>, window_params = [{transform_indices = @transform_0, window_bounds = array<i64: 16, 32>}, {pipeline_mode = #tpu.pipeline_mode<synchronous>, transform_indices = @transform_1, window_bounds = array<i64: 32, 64>}, {pipeline_mode = #tpu.pipeline_mode<synchronous>, transform_indices = @transform_2, window_bounds = array<i64: 1, 64>}, {pipeline_mode = #tpu.pipeline_mode<synchronous>, transform_indices = @transform_3, window_bounds = array<i64: 1, 64>}, {pipeline_mode = #tpu.pipeline_mode<synchronous>, transform_indices = @transform_4, window_bounds = array<i64: 1, 1>}, {transform_indices = @transform_5, window_bounds = array<i64: 16, 1>}]} {
    %c0 = arith.constant 0 : index
    %c0_0 = arith.constant 0 : index
    %0 = vector.load %arg1[%c0, %c0_0] : memref<16x32xf32, #tpu.memory_space<vmem>>, vector<16x32xf32>
    %c0_1 = arith.constant 0 : index
    %c0_2 = arith.constant 0 : index
    %1 = vector.load %arg2[%c0_1, %c0_2] : memref<32x64xf32, #tpu.memory_space<vmem>>, vector<32x64xf32>
    %cst = arith.constant dense<0.000000e+00> : vector<16x64xf32>
    %2 = tpu.matmul %0, %1, %cst {dimension_numbers = #tpu.dot_dimension_numbers<[1], [0], [0], [1], [0, 0, 1, 1], [], []>} : vector<16x32xf32>, vector<32x64xf32>, vector<16x64xf32> -> vector<16x64xf32>
    %c0_3 = arith.constant 0 : index
    %c0_4 = arith.constant 0 : index
    %3 = vector.load %arg3[%c0_3, %c0_4] : memref<1x64xf32, #tpu.memory_space<vmem>>, vector<1x64xf32>
    %4 = vector.broadcast %3 : vector<1x64xf32> to vector<16x64xf32>
    %5 = arith.addf %2, %4 : vector<16x64xf32>
    %cst_5 = arith.constant 5.000000e-01 : f32
    %6 = vector.broadcast %cst_5 : f32 to vector<16x64xf32>
    %7 = arith.mulf %6, %5 : vector<16x64xf32>
    %cst_6 = arith.constant 0.707106769 : f32
    %8 = vector.broadcast %cst_6 : f32 to vector<16x64xf32>
    %9 = arith.mulf %5, %8 : vector<16x64xf32>
    %10 = math.erf %9 : vector<16x64xf32>
    %cst_7 = arith.constant 1.000000e+00 : f32
    %11 = vector.broadcast %cst_7 : f32 to vector<16x64xf32>
    %12 = arith.addf %11, %10 : vector<16x64xf32>
    %13 = arith.mulf %7, %12 : vector<16x64xf32>
    %c0_8 = arith.constant 0 : index
    %c0_9 = arith.constant 0 : index
    %14 = vector.load %arg4[%c0_8, %c0_9] : memref<1x64xf32, #tpu.memory_space<vmem>>, vector<1x64xf32>
    %15 = vector.broadcast %14 : vector<1x64xf32> to vector<16x64xf32>
    %16 = arith.mulf %13, %15 : vector<16x64xf32>
    %cst_10 = arith.constant dense<0.000000e+00> : vector<16xf32>
    %17 = vector.multi_reduction <add>, %16, %cst_10 [1] : vector<16x64xf32> to vector<16xf32>
    %18 = vector.shape_cast %17 : vector<16xf32> to vector<16x1xf32>
    %c0_11 = arith.constant 0 : index
    %c0_12 = arith.constant 0 : index
    %19 = vector.load %arg5[%c0_11, %c0_12] : memref<1x1xf32, #tpu.memory_space<vmem>>, vector<1x1xf32>
    %20 = vector.broadcast %19 : vector<1x1xf32> to vector<16x1xf32>
    %21 = arith.addf %18, %20 : vector<16x1xf32>
    %c0_13 = arith.constant 0 : index
    %c0_14 = arith.constant 0 : index
    %22 = vector.load %arg6[%c0_13, %c0_14] : memref<16x1xf32, #tpu.memory_space<vmem>>, vector<16x1xf32>
    tpu.vector_store %arg6[%c0_13, %c0_14], %21 {strides = array<i32>} : memref<16x1xf32, #tpu.memory_space<vmem>>, vector<16x1xf32>,
    return
  }
  func.func @transform_0(%arg0: i32) -> (i32, i32) {
    %c0_i32 = arith.constant 0 : i32
    %c0_i32_0 = arith.constant 0 : i32
    return %arg0, %c0_i32 : i32, i32
  }
  func.func @transform_1(%arg0: i32) -> (i32, i32) {
    %c0_i32 = arith.constant 0 : i32
    %c0_i32_0 = arith.constant 0 : i32
    %c0_i32_1 = arith.constant 0 : i32
    return %c0_i32, %c0_i32_0 : i32, i32
  }
  func.func @transform_2(%arg0: i32) -> (i32, i32) {
    %c0_i32 = arith.constant 0 : i32
    %c0_i32_0 = arith.constant 0 : i32
    %c0_i32_1 = arith.constant 0 : i32
    return %c0_i32, %c0_i32_0 : i32, i32
  }
  func.func @transform_3(%arg0: i32) -> (i32, i32) {
    %c0_i32 = arith.constant 0 : i32
    %c0_i32_0 = arith.constant 0 : i32
    %c0_i32_1 = arith.constant 0 : i32
    return %c0_i32, %c0_i32_0 : i32, i32
  }
  func.func @transform_4(%arg0: i32) -> (i32, i32) {
    %c0_i32 = arith.constant 0 : i32
    %c0_i32_0 = arith.constant 0 : i32
    %c0_i32_1 = arith.constant 0 : i32
    return %c0_i32, %c0_i32_0 : i32, i32
  }
  func.func @transform_5(%arg0: i32) -> (i32, i32) {
    %c0_i32 = arith.constant 0 : i32
    %c0_i32_0 = arith.constant 0 : i32
    return %arg0, %c0_i32 : i32, i32
  }
}

</mosaic_0001>

<llo_original>
// kernel: tpu_custom_call.1
$region0: #{tpu_custom_call.1}
  #allocation0 [shape = 'u32[]', space=smem, size = 0x4, offset = 0x4, fixed_abs, tag = 'smem constant byte address 0x4 - core index']
  #allocation1 [shape = 'u32[144,128]{1,0:T(1,128)}', space=vmem, size = 0x12000, scoped, tag = 'internal scratch']
  #allocation2 [shape = 'f32[1,1]{1,0:T(1,128)S(1)}', space=vmem, size = 0x200, scoped, tag = 'scoped memory for tpu_custom_call.1']
  %s0 = inlined_call_operand.hbm [shape: f32[16,32], index: 0, kind: input, shape index: {}]
  %s1 = inlined_call_operand.hbm [shape: f32[32,64], index: 1, kind: input, shape index: {}]
  %s2 = inlined_call_operand.vmem [shape: f32[1,64], index: 2, kind: input, shape index: {}]
  %s3 = inlined_call_operand.vmem [shape: f32[1,64], index: 3, kind: input, shape index: {}]
  %s4 = inlined_call_operand.<no memory space> [shape: f32[1,1], index: 4, kind: input, shape index: {}]
  %s5 = inlined_call_operand.vmem [shape: f32[16,1], index: 5, kind: output, shape index: {}]
  %s6 = sld [smem:[#allocation0]]
  $region38: #{tpu_custom_call.1} parent=0
    _
  %s8 = ssub.s32 1, %s6
  %s9 = scalar_select 0, %s8, %s6
  %v10 = vstv %s4
  %11 = vst [vmem:[#allocation2] sm:$0x1] %v10
  $region1: #{tpu_custom_call.1} parent=0
    #allocation3 [shape = 'u8[8192]{0}', space=vmem, size = 0x2000, scoped, tag = 'input window, operand 0, single buffered']
    #allocation4 [shape = 's32[1]{0}', space=sflag, size = 0x4, scoped, tag = 'scoped memory for tpu_custom_call.1']
    #allocation5 [shape = 'u8[16384]{0}', space=vmem, size = 0x4000, scoped, tag = 'input window, operand 1, single buffered']
    #allocation6 [shape = 's32[1]{0}', space=sflag, size = 0x4, scoped, tag = 'scoped memory for tpu_custom_call.1']
    %12 = vsyncpa [#allocation4], 0
    %13 = vsyncpa [#allocation6], 0
    // Predicated region
    $region2: #{tpu_custom_call.1} parent=1 // pred_check
      _
    $region3: #{tpu_custom_call.1} parent=1 // pred_check_branch
      %15 = sbr.rel (0) target = $region5
    $region4: #{tpu_custom_call.1} parent=1 // pred_region
      %s17 = ssub.s32 256, 256
      %18 = vsyncadd [#allocation4], %s17
      %s19 = sshll.u32 [#allocation3], 4
      %s20 = int_to_ptr.vmem [resolvable:$true] %s19
      %25 = dma.hbm_to_vmem [thread:$0]  %s0, 256, %s20, [#allocation4], 128, 128, 8
    $region5: #{tpu_custom_call.1} parent=1 // pred_fallthru
      _
    // Predicated region
    $region6: #{tpu_custom_call.1} parent=1 // pred_check
      _
    $region7: #{tpu_custom_call.1} parent=1 // pred_check_branch
      %27 = sbr.rel (0) target = $region9
    $region8: #{tpu_custom_call.1} parent=1 // pred_region
      %s29 = ssub.s32 512, 512
      %30 = vsyncadd [#allocation6], %s29
      %s31 = sshll.u32 [#allocation5], 4
      %s32 = int_to_ptr.vmem [resolvable:$true] %s31
      %37 = dma.hbm_to_vmem [thread:$0]  %s1, 512, %s32, [#allocation6], 128, 128, 8
    $region9: #{tpu_custom_call.1} parent=1 // pred_fallthru
      _
    // Predicated region
    $region10: #{tpu_custom_call.1} parent=1 // pred_check
      _
    $region11: #{tpu_custom_call.1} parent=1 // pred_check_branch
      %39 = sbr.rel (0) target = $region13
    $region12: #{tpu_custom_call.1} parent=1 // pred_region
      _
    $region13: #{tpu_custom_call.1} parent=1 // pred_fallthru
      _
    // Predicated region
    $region14: #{tpu_custom_call.1} parent=1 // pred_check
      _
    $region15: #{tpu_custom_call.1} parent=1 // pred_check_branch
      %41 = sbr.rel (0) target = $region17
    $region16: #{tpu_custom_call.1} parent=1 // pred_region
      _
    $region17: #{tpu_custom_call.1} parent=1 // pred_fallthru
      _
    // Predicated region
    $region18: #{tpu_custom_call.1} parent=1 // pred_check
      _
    $region19: #{tpu_custom_call.1} parent=1 // pred_check_branch
      %43 = sbr.rel (0) target = $region21
    $region20: #{tpu_custom_call.1} parent=1 // pred_region
      _
    $region21: #{tpu_custom_call.1} parent=1 // pred_fallthru
      _
    // Predicated region
    $region22: #{tpu_custom_call.1} parent=1 // pred_check
      _
    $region23: #{tpu_custom_call.1} parent=1 // pred_check_branch
      %45 = sbr.rel (0) target = $region25
    $region24: #{tpu_custom_call.1} parent=1 // pred_region
      %46 = dma.done [#allocation4], 256
    $region25: #{tpu_custom_call.1} parent=1 // pred_fallthru
      _
    // Predicated region
    $region26: #{tpu_custom_call.1} parent=1 // pred_check
      _
    $region27: #{tpu_custom_call.1} parent=1 // pred_check_branch
      %48 = sbr.rel (0) target = $region29
    $region28: #{tpu_custom_call.1} parent=1 // pred_region
      %49 = dma.done [#allocation6], 512
    $region29: #{tpu_custom_call.1} parent=1 // pred_fallthru
      _
    %v50 = vld [vmem:[#allocation3] sm:$0xff]
    %v51 = vld [vmem:[#allocation3 + $0x8] sm:$0xff]
    %v52 = vld [vmem:[#allocation5] sm:$0xff]
    %v53 = vld [vmem:[#allocation5 + $0x8] sm:$0xff]
    %v54 = vld [vmem:[#allocation5 + $0x10] sm:$0xff]
    %v55 = vld [vmem:[#allocation5 + $0x18] sm:$0xff]
    %v56 = vld [vmem:[%s2] sm:$0x1]
    %v58 = vlaneseq
    %v59 = vshrl.u32 %v58, 7
    %v60 = vsub.s32 0, %v59
    %v61 = vrot.slane %v56, %v60
    %vm63 = vcmask 261120
    %v65 = vsel %vm63, %v50, 0
    %v68 = vsel %vm63, %v51, 0
    %70 = vmatprep.subr.mxu0 0.0
    %71 = vmatpush1.msra.mxu0 0.0
    %72 = vmatprep.subr.mxu0 0.0
    %73 = vmatpush1.msra.mxu0 0.0
    %74 = vmatprep.subr.mxu0 0.0
    %75 = vmatpush1.msra.mxu0 0.0
    %76 = vmatprep.subr.mxu0 0.0
    %77 = vmatpush1.msra.mxu0 0.0
    %78 = vmatprep.subr.mxu0 0.0
    %79 = vmatpush1.msra.mxu0 0.0
    %80 = vmatprep.subr.mxu0 0.0
    %81 = vmatpush1.msra.mxu0 0.0
    %82 = vmatprep.subr.mxu0 0.0
    %83 = vmatpush1.msra.mxu0 0.0
    %84 = vmatprep.subr.mxu0 0.0
    %85 = vmatpush1.msra.mxu0 0.0
    %86 = vmatprep.subr.mxu0 0.0
    %87 = vmatpush1.msra.mxu0 0.0
    %88 = vmatprep.subr.mxu0 0.0
    %89 = vmatpush1.msra.mxu0 0.0
    %90 = vmatprep.subr.mxu0 0.0
    %91 = vmatpush1.msra.mxu0 0.0
    %92 = vmatprep.subr.mxu0 0.0
    %93 = vmatpush1.msra.mxu0 0.0
    %94 = vmatprep.subr.mxu0 0.0
    %95 = vmatpush1.msra.mxu0 %v55
    %96 = vmatprep.subr.mxu0 0.0
    %97 = vmatpush1.msra.mxu0 %v54
    %98 = vmatprep.subr.mxu0 0.0
    %99 = vmatpush1.msra.mxu0 %v53
    %100 = vmatprep.subr.mxu0 0.0
    %101 = vmatpush1.msra.mxu0 %v52
    %102 = vmatprep.subr.mxu0 0.0
    %103 = vmatpush2.msra.mxu0 0.0
    %104 = vmatprep.subr.mxu0 0.0
    %105 = vmatpush2.msra.mxu0 0.0
    %106 = vmatprep.subr.mxu0 0.0
    %107 = vmatpush2.msra.mxu0 0.0
    %108 = vmatprep.subr.mxu0 0.0
    %109 = vmatpush2.msra.mxu0 0.0
    %110 = vmatprep.subr.mxu0 0.0
    %111 = vmatpush2.msra.mxu0 0.0
    %112 = vmatprep.subr.mxu0 0.0
    %113 = vmatpush2.msra.mxu0 0.0
    %114 = vmatprep.subr.mxu0 0.0
    %115 = vmatpush2.msra.mxu0 0.0
    %116 = vmatprep.subr.mxu0 0.0
    %117 = vmatpush2.msra.mxu0 0.0
    %118 = vmatprep.subr.mxu0 0.0
    %119 = vmatpush2.msra.mxu0 0.0
    %120 = vmatprep.subr.mxu0 0.0
    %121 = vmatpush2.msra.mxu0 0.0
    %122 = vmatprep.subr.mxu0 0.0
    %123 = vmatpush2.msra.mxu0 0.0
    %124 = vmatprep.subr.mxu0 0.0
    %125 = vmatpush2.msra.mxu0 0.0
    %126 = vmatprep.subr.mxu0 0.0
    %127 = vmatpush2.msra.mxu0 0.0
    %128 = vmatprep.subr.mxu0 0.0
    %129 = vmatpush2.msra.mxu0 0.0
    %130 = vmatprep.subr.mxu0 0.0
    %131 = vmatpush2.msra.mxu0 0.0
    %132 = vmatprep.subr.mxu0 0.0
    %133 = vmatpush2.msra.mxu0 0.0
    %134 = vmatprep.mubr.f32.mxu0 0.0
    %135 = vmatmul.mubr.f32.gmra.mxu0 %v65
    %v136 = vpop.f32.mrf.mxu0
    %v137 = vadd.f32 %v61, %v136
    %v138 = vpop.f32.mrf.mxu0
    %139 = vmatprep.mubr.f32.mxu0 0.0
    %140 = vmatmul.mubr.f32.gmra.mxu0 %v68
    %v141 = vpop.f32.mrf.mxu0
    %v142 = vadd.f32 %v61, %v141
    %v143 = vpop.f32.mrf.mxu0
    %144 = vdwg.mxu0
    %v145 = vmul.f32 %v137, 0.5
    %v146 = vmul.f32 %v142, 0.5
    %v147 = vmul.f32 %v137, 0.70710677
    %v148 = vmul.f32 %v142, 0.70710677
    %v149 = verf.f32.pop %v147
    %v150 = verf.f32.pop %v148
    %v151 = vadd.f32 %v149, 1.0
    %v152 = vadd.f32 %v150, 1.0
    %v153 = vmul.f32 %v145, %v151
    %v154 = vmul.f32 %v146, %v152
    %v155 = vld [vmem:[%s3] sm:$0x1]
    %v157 = vlaneseq
    %v158 = vshrl.u32 %v157, 7
    %v159 = vsub.s32 0, %v158
    %v160 = vrot.slane %v155, %v159
    %v162 = vmul.f32 %v153, %v160
    %v163 = vmul.f32 %v154, %v160
    %vm164 = vcmask 523264
    %v165 = vsel %vm164, %v162, 0.0
    %166 = vadd.xlane.f32.xlu0 %v165
    %v167 = vpop.xlane.xlu0 %166
    %v168 = vsel %vm164, %v163, 0.0
    %169 = vadd.xlane.f32.xlu0 %v168
    %v170 = vpop.xlane.xlu0 %169
    %v171 = vld [vmem:[#allocation2] sm:$0x1]
    %v173 = vlaneseq
    %v174 = vshrl.u32 %v173, 7
    %v175 = vsub.s32 0, %v174
    %v176 = vrot.slane %v171, %v175
    %v178 = vadd.f32 %v167, %v176
    %v179 = vadd.f32 %v170, %v176
    %vm180 = vcmask 7168
    %181 = vst.msk [vmem:[%s5] sm:$0xff] %vm180, %v178
    %182 = vst.msk [vmem:[%s5 + $0x8] sm:$0xff] %vm180, %v179
    // Predicated region
    $region30: #{tpu_custom_call.1} parent=1 // pred_check
      _
    $region31: #{tpu_custom_call.1} parent=1 // pred_check_branch
      %184 = sbr.rel (0) target = $region33
    $region32: #{tpu_custom_call.1} parent=1 // pred_region
      _
    $region33: #{tpu_custom_call.1} parent=1 // pred_fallthru
      _
    // Predicated region
    $region34: #{tpu_custom_call.1} parent=1 // pred_check
      _
    $region35: #{tpu_custom_call.1} parent=1 // pred_check_branch
      %186 = sbr.rel (0) target = $region37
    $region36: #{tpu_custom_call.1} parent=1 // pred_region
      _
    $region37: #{tpu_custom_call.1} parent=1 // pred_fallthru
      _
    %187 = vsyncpa [#allocation4], 1
    %188 = vsyncpa [#allocation6], 1

</llo_original>
